<compile_context>
chip_gen: v6e
topology: v6e:2x2x1
jax: 0.10.0
libtpu: 0.0.40
codegen_flags: <defaults>
</compile_context>

<pallas_src>
import jax
import jax.numpy as jnp
from jax.experimental import pallas as pl
from jax.experimental.pallas import tpu as pltpu


def _round_up(x: int, m: int) -> int:
    return ((x + m - 1) // m) * m


def _cdiv(a: int, b: int) -> int:
    return (a + b - 1) // b


def _vmem_budget_bytes() -> int:
    """Scoped-VMEM budget: ~0.75 * per-core capacity, capped, with a safe floor."""
    cap = 64 * 1024 * 1024
    try:
        info = pltpu.get_tpu_info()
        cap = int(getattr(info, "vmem_capacity_bytes", cap))
    except Exception:
        pass
    return max(32 * 1024 * 1024, min((cap * 3) // 4, 96 * 1024 * 1024))


# ---------------------------------------------------------------------------
# Kernels
# ---------------------------------------------------------------------------
def _pw_conv1d_kernel_fullk(x_ref, w_ref, b_ref, o_ref):
    # x_ref: (C_in, tn)  -- full reduction strip of x[b], time tile on lanes
    # w_ref: (tm, C_in)  -- full reduction strip of W (resident across b, n)
    # b_ref: (tm, 1)     -- bias tile (f32)
    # o_ref: (tm, tn)    -- output tile
    acc = jnp.dot(w_ref[...], x_ref[...], preferred_element_type=jnp.float32)
    o_ref[...] = (acc + b_ref[...]).astype(o_ref.dtype)


def _pw_conv1d_kernel_ktiled(x_ref, w_ref, b_ref, o_ref, acc_ref):
    # Fallback for very large C_in: reduction axis tiled (innermost grid axis).
    k = pl.program_id(3)

    @pl.when(k == 0)
    def _():
        acc_ref[...] = jnp.zeros_like(acc_ref)

    acc_ref[...] += jnp.dot(
        w_ref[...], x_ref[...], preferred_element_type=jnp.float32
    )

    @pl.when(k == pl.num_programs(3) - 1)
    def _():
        o_ref[...] = (acc_ref[...] + b_ref[...]).astype(o_ref.dtype)


# ---------------------------------------------------------------------------
# Wrapper
# ---------------------------------------------------------------------------
def pointwise_conv1d_pallas(x, weight, bias=None, *, stride=1, padding=0):
    """1x1 Conv1d: x (B, C_in, T), weight (C_out, C_in, 1) -> (B, C_out, T_out)."""
    B, C_in, T = x.shape
    C_out = weight.shape[0]
    w2 = weight.reshape(C_out, C_in).astype(x.dtype)

    if bias is None:
        bias = jnp.zeros((C_out,), dtype=jnp.float32)
    b2 = bias.reshape(C_out, 1).astype(jnp.float32)

    # kernel_size == 1: padding/stride reduce to zero-pad + time subsample.
    if padding:
        x = jnp.pad(x, ((0, 0), (0, 0), (padding, padding)))
    if stride != 1:
        x = x[:, :, ::stride]
    T_out = x.shape[2]

    # Fold batch into the lane axis when T alone would badly underfill the
    # 128-wide lanes (small-T shapes): compute W @ (C_in, B*T) instead.
    fold = (T_out < 128) and (B > 1)
    if fold:
        x_eff = jnp.transpose(x, (1, 0, 2)).reshape(1, C_in, B * T_out)
    else:
        x_eff = x
    B_eff, _, N_eff = x_eff.shape

    isz = x.dtype.itemsize
    osz = x.dtype.itemsize
    budget = _vmem_budget_bytes()

    # C_out tile: full extent when it fits one tile (no padding / clean block),
    # otherwise 256 rows (multiple of every sublane packing, matches MXU).
    tm = C_out if C_out <= 256 else 256

    # Hoist the full C_in reduction strip into VMEM when it fits comfortably
    # double-buffered on every generation (<= 4096 f32 / 8192 bf16 channels).
    hoist_k = (C_in * isz) <= 16 * 1024

    if hoist_k:
        # Lane tile: as large as the VMEM budget allows (double-buffered
        # x / out tiles + resident W strip), capped at 2048 lanes.
        if N_eff <= 128:
            tn = N_eff
        else:
            fixed = 2 * (tm * C_in * isz + tm * 4)  # W strip + bias, 2 buffers
            cap = (budget - fixed) // (2 * (C_in * isz + tm * osz))
            tn = max(128, min((cap // 128) * 128, 2048, (N_eff // 128) * 128))

        grid = (_cdiv(C_out, tm), B_eff, _cdiv(N_eff, tn))

        out = pl.pallas_call(
            _pw_conv1d_kernel_fullk,
            out_shape=jax.ShapeDtypeStruct((B_eff, C_out, N_eff), x.dtype),
            grid_spec=pltpu.PrefetchScalarGridSpec(
                num_scalar_prefetch=0,
                grid=grid,
                in_specs=[
                    # x[b]: full C_in strip, time tile on lanes.
                    pl.BlockSpec((None, C_in, tn), lambda m, b, n: (b, 0, n)),
                    # W strip: depends only on m (outermost) -> stays resident
                    # in VMEM across the whole inner (b, n) sweep.
                    pl.BlockSpec((tm, C_in), lambda m, b, n: (m, 0)),
                    # bias: also m-only.
                    pl.BlockSpec((tm, 1), lambda m, b, n: (m, 0)),
                ],
                out_specs=pl.BlockSpec(
                    (None, tm, tn), lambda m, b, n: (b, m, n)
                ),
            ),
            compiler_params=pltpu.CompilerParams(
                dimension_semantics=("parallel", "parallel", "parallel"),
                vmem_limit_bytes=int(budget),
            ),
        )(x_eff, w2, b2)
    else:
        # Rare path: C_in too large to hoist.  Tile the reduction axis
        # (innermost), zero-padding ONLY C_in so padded K blocks are exact.
        target_tk = max(512, 8192 // isz)
        k_tiles = _cdiv(C_in, target_tk)
        tk = _round_up(_cdiv(C_in, k_tiles), 128)
        K_pad = tk * k_tiles
        x_p = x_eff
        w_p = w2
        if K_pad != C_in:
            x_p = jnp.pad(x_eff, ((0, 0), (0, K_pad - C_in), (0, 0)))
            w_p = jnp.pad(w2, ((0, 0), (0, K_pad - C_in)))

        if N_eff <= 128:
            tn = N_eff
        else:
            fixed = 2 * (tm * tk * isz + tm * 4)
            cap = (budget - fixed) // (2 * (tk * isz + tm * osz) + 4 * tm)
            tn = max(128, min((cap // 128) * 128, 2048, (N_eff // 128) * 128))

        grid = (_cdiv(C_out, tm), B_eff, _cdiv(N_eff, tn), k_tiles)

        out = pl.pallas_call(
            _pw_conv1d_kernel_ktiled,
            out_shape=jax.ShapeDtypeStruct((B_eff, C_out, N_eff), x.dtype),
            grid_spec=pltpu.PrefetchScalarGridSpec(
                num_scalar_prefetch=0,
                grid=grid,
                in_specs=[
                    pl.BlockSpec((None, tk, tn), lambda m, b, n, k: (b, k, n)),
                    pl.BlockSpec((tm, tk), lambda m, b, n, k: (m, k)),
                    pl.BlockSpec((tm, 1), lambda m, b, n, k: (m, 0)),
                ],
                out_specs=pl.BlockSpec(
                    (None, tm, tn), lambda m, b, n, k: (b, m, n)
                ),
                scratch_shapes=[pltpu.VMEM((tm, tn), jnp.float32)],
            ),
            compiler_params=pltpu.CompilerParams(
                dimension_semantics=(
                    "parallel", "parallel", "parallel", "arbitrary"
                ),
                vmem_limit_bytes=int(budget),
            ),
        )(x_p, w_p, b2)

    if fold:
        out = jnp.transpose(out.reshape(C_out, B, T_out), (1, 0, 2))
    return out


# ---------------------------------------------------------------------------
# Pure-JAX reference
# ---------------------------------------------------------------------------
def pointwise_conv1d_reference(x, weight, bias=None, *, stride=1, padding=0):
    w2 = weight.reshape(weight.shape[0], weight.shape[1])
    if padding:
        x = jnp.pad(x, ((0, 0), (0, 0), (padding, padding)))
    if stride != 1:
        x = x[:, :, ::stride]
    y = jnp.einsum("oc,bct->bot", w2, x, precision=jax.lax.Precision.HIGHEST)
    if bias is not None:
        y = y + bias[None, :, None]
    return y


if __name__ == "__main__":
    key = jax.random.PRNGKey(0)
    k1, k2, k3 = jax.random.split(key, 3)

    # Small shapes consistent with the module: (batch, in_channels, time).
    B, C_in, C_out, T = 2, 32, 64, 16
    # Integer-valued data -> results are bit-exact regardless of the MXU
    # precision path, so we can compare tightly against the reference.
    x = jnp.round(jax.random.normal(k1, (B, C_in, T), dtype=jnp.float32) * 2.0)
    weight = jnp.round(
        jax.random.normal(k2, (C_out, C_in, 1), dtype=jnp.float32) * 2.0
    )
    bias = jnp.round(jax.random.normal(k3, (C_out,), dtype=jnp.float32) * 2.0)

    # Test 1: small T -> folded (B*T on lanes) path, defaults stride/padding.
    out = jax.block_until_ready(pointwise_conv1d_pallas(x, weight, bias))
    ref = pointwise_conv1d_reference(x, weight, bias)
    assert out.shape == (B, C_out, T), out.shape
    assert out.dtype == x.dtype
    assert jnp.allclose(out, ref, atol=1e-5, rtol=1e-5), "mismatch (folded path)"

    # Test 2: longer time axis + stride/padding -> unfolded path, boundary tile.
    T2 = 256
    x2 = jnp.round(jax.random.normal(k1, (B, C_in, T2), dtype=jnp.float32) * 2.0)
    out2 = jax.block_until_ready(
        pointwise_conv1d_pallas(x2, weight, bias, stride=2, padding=1)
    )
    ref2 = pointwise_conv1d_reference(x2, weight, bias, stride=2, padding=1)
    assert out2.shape == ref2.shape, (out2.shape, ref2.shape)
    assert jnp.allclose(out2, ref2, atol=1e-5, rtol=1e-5), "mismatch (tiled path)"

    print("KERNEL_OK")
</pallas_src>

<mosaic_0001>
module attributes {stable_mosaic.version = 11 : i64} {
  func.func @_pw_conv1d_kernel_fullk(%arg0: i32, %arg1: i32, %arg2: i32, %arg3: memref<1x32x32xf32, #tpu.memory_space<vmem>>, %arg4: memref<64x32xf32, #tpu.memory_space<vmem>>, %arg5: memref<64x1xf32, #tpu.memory_space<vmem>>, %arg6: memref<1x64x32xf32, #tpu.memory_space<vmem>>) attributes {dimension_semantics = [#tpu.dimension_semantics<parallel>, #tpu.dimension_semantics<parallel>, #tpu.dimension_semantics<parallel>], iteration_bounds = array<i64: 1, 1, 1>, scalar_prefetch = 0 : i64, scratch_operands = 0 : i64, tpu.core_type = #tpu.core_type<tc>, window_params = [{transform_indices = @transform_0, window_bounds = array<i64: 1, 32, 32>}, {transform_indices = @transform_1, window_bounds = array<i64: 64, 32>}, {transform_indices = @transform_2, window_bounds = array<i64: 64, 1>}, {transform_indices = @transform_3, window_bounds = array<i64: 1, 64, 32>}]} {
    %c0 = arith.constant 0 : index
    %c0_0 = arith.constant 0 : index
    %0 = vector.load %arg4[%c0, %c0_0] : memref<64x32xf32, #tpu.memory_space<vmem>>, vector<64x32xf32>
    %c0_1 = arith.constant 0 : index
    %c0_2 = arith.constant 0 : index
    %c0_3 = arith.constant 0 : index
    %1 = vector.load %arg3[%c0_1, %c0_2, %c0_3] : memref<1x32x32xf32, #tpu.memory_space<vmem>>, vector<1x32x32xf32>
    %2 = vector.shape_cast %1 : vector<1x32x32xf32> to vector<32x32xf32>
    %cst = arith.constant dense<0.000000e+00> : vector<64x32xf32>
    %3 = tpu.matmul %0, %2, %cst {dimension_numbers = #tpu.dot_dimension_numbers<[1], [0], [0], [1], [0, 0, 1, 1], [], []>} : vector<64x32xf32>, vector<32x32xf32>, vector<64x32xf32> -> vector<64x32xf32>
    %c0_4 = arith.constant 0 : index
    %c0_5 = arith.constant 0 : index
    %4 = vector.load %arg5[%c0_4, %c0_5] : memref<64x1xf32, #tpu.memory_space<vmem>>, vector<64x1xf32>
    %5 = vector.broadcast %4 : vector<64x1xf32> to vector<64x32xf32>
    %6 = arith.addf %3, %5 : vector<64x32xf32>
    %c0_6 = arith.constant 0 : index
    %c0_7 = arith.constant 0 : index
    %c0_8 = arith.constant 0 : index
    %7 = vector.load %arg6[%c0_6, %c0_7, %c0_8] : memref<1x64x32xf32, #tpu.memory_space<vmem>>, vector<1x64x32xf32>
    %8 = vector.shape_cast %7 : vector<1x64x32xf32> to vector<64x32xf32>
    %9 = vector.shape_cast %6 : vector<64x32xf32> to vector<1x64x32xf32>
    tpu.vector_store %arg6[%c0_6, %c0_7, %c0_8], %9 {strides = array<i32>} : memref<1x64x32xf32, #tpu.memory_space<vmem>>, vector<1x64x32xf32>,
    return
  }
  func.func @transform_0(%arg0: i32, %arg1: i32, %arg2: i32) -> (i32, i32, i32) {
    %c0_i32 = arith.constant 0 : i32
    %c0_i32_0 = arith.constant 0 : i32
    return %arg1, %c0_i32, %arg2 : i32, i32, i32
  }
  func.func @transform_1(%arg0: i32, %arg1: i32, %arg2: i32) -> (i32, i32) {
    %c0_i32 = arith.constant 0 : i32
    %c0_i32_0 = arith.constant 0 : i32
    return %arg0, %c0_i32 : i32, i32
  }
  func.func @transform_2(%arg0: i32, %arg1: i32, %arg2: i32) -> (i32, i32) {
    %c0_i32 = arith.constant 0 : i32
    %c0_i32_0 = arith.constant 0 : i32
    return %arg0, %c0_i32 : i32, i32
  }
  func.func @transform_3(%arg0: i32, %arg1: i32, %arg2: i32) -> (i32, i32, i32) {
    %c0_i32 = arith.constant 0 : i32
    return %arg1, %arg0, %arg2 : i32, i32, i32
  }
}

</mosaic_0001>

<llo_original>
// kernel: tpu_custom_call.1
$region0: #{tpu_custom_call.1}
  #allocation0 [shape = 'u32[]', space=smem, size = 0x4, offset = 0x4, fixed_abs, tag = 'smem constant byte address 0x4 - core index']
  #allocation1 [shape = 'u32[144,128]{1,0:T(1,128)}', space=vmem, size = 0x12000, scoped, tag = 'internal scratch']
  %s0 = inlined_call_operand.vmem [shape: f32[1,32,32], index: 0, kind: input, shape index: {}]
  %s1 = inlined_call_operand.vmem [shape: f32[64,32], index: 1, kind: input, shape index: {}]
  %s2 = inlined_call_operand.vmem [shape: f32[64,1], index: 2, kind: input, shape index: {}]
  %s3 = inlined_call_operand.vmem [shape: f32[1,64,32], index: 3, kind: output, shape index: {}]
  %s4 = sld [smem:[#allocation0]]
  $region22: #{tpu_custom_call.1} parent=0
    _
  %s6 = ssub.s32 1, %s4
  %s7 = scalar_select 0, %s6, %s4
  // Predicated region
  $region2: #{tpu_custom_call.1} parent=0 // pred_check
    _
  $region3: #{tpu_custom_call.1} parent=0 // pred_check_branch
    %9 = sbr.rel (0) target = $region5
  $region4: #{tpu_custom_call.1} parent=0 // pred_region
    _
  $region5: #{tpu_custom_call.1} parent=0 // pred_fallthru
    _
  // Predicated region
  $region6: #{tpu_custom_call.1} parent=0 // pred_check
    _
  $region7: #{tpu_custom_call.1} parent=0 // pred_check_branch
    %11 = sbr.rel (0) target = $region9
  $region8: #{tpu_custom_call.1} parent=0 // pred_region
    _
  $region9: #{tpu_custom_call.1} parent=0 // pred_fallthru
    _
  // Predicated region
  $region10: #{tpu_custom_call.1} parent=0 // pred_check
    _
  $region11: #{tpu_custom_call.1} parent=0 // pred_check_branch
    %13 = sbr.rel (0) target = $region13
  $region12: #{tpu_custom_call.1} parent=0 // pred_region
    _
  $region13: #{tpu_custom_call.1} parent=0 // pred_fallthru
    _
  %v14 = vld [vmem:[%s1] sm:$0xff]
  %v15 = vld [vmem:[%s1 + $0x8] sm:$0xff]
  %v16 = vld [vmem:[%s1 + $0x10] sm:$0xff]
  %v17 = vld [vmem:[%s1 + $0x18] sm:$0xff]
  %v18 = vld [vmem:[%s1 + $0x20] sm:$0xff]
  %v19 = vld [vmem:[%s1 + $0x28] sm:$0xff]
  %v20 = vld [vmem:[%s1 + $0x30] sm:$0xff]
  %v21 = vld [vmem:[%s1 + $0x38] sm:$0xff]
  %v22 = vld [vmem:[%s0] sm:$0xff]
  %v23 = vld [vmem:[%s0 + $0x8] sm:$0xff]
  %v24 = vld [vmem:[%s0 + $0x10] sm:$0xff]
  %v25 = vld [vmem:[%s0 + $0x18] sm:$0xff]
  %v26 = vld [vmem:[%s2] sm:$0xff]
  %v27 = vld [vmem:[%s2 + $0x8] sm:$0xff]
  %v28 = vld [vmem:[%s2 + $0x10] sm:$0xff]
  %v29 = vld [vmem:[%s2 + $0x18] sm:$0xff]
  %v30 = vld [vmem:[%s2 + $0x20] sm:$0xff]
  %v31 = vld [vmem:[%s2 + $0x28] sm:$0xff]
  %v32 = vld [vmem:[%s2 + $0x30] sm:$0xff]
  %v33 = vld [vmem:[%s2 + $0x38] sm:$0xff]
  %35 = vset.pattern.permute.xlu0 0
  %36 = vperm.xlu0 %35, %v26
  %v37 = vpop.permute.xlu0 %36
  %40 = vset.pattern.permute.xlu0 0
  %41 = vperm.xlu0 %40, %v27
  %v42 = vpop.permute.xlu0 %41
  %45 = vset.pattern.permute.xlu0 0
  %46 = vperm.xlu0 %45, %v28
  %v47 = vpop.permute.xlu0 %46
  %50 = vset.pattern.permute.xlu0 0
  %51 = vperm.xlu0 %50, %v29
  %v52 = vpop.permute.xlu0 %51
  %55 = vset.pattern.permute.xlu0 0
  %56 = vperm.xlu0 %55, %v30
  %v57 = vpop.permute.xlu0 %56
  %60 = vset.pattern.permute.xlu0 0
  %61 = vperm.xlu0 %60, %v31
  %v62 = vpop.permute.xlu0 %61
  %65 = vset.pattern.permute.xlu0 0
  %66 = vperm.xlu0 %65, %v32
  %v67 = vpop.permute.xlu0 %66
  %70 = vset.pattern.permute.xlu0 0
  %71 = vperm.xlu0 %70, %v33
  %v72 = vpop.permute.xlu0 %71
  %vm74 = vcmask 261120
  %v76 = vsel %vm74, %v14, 0
  %v79 = vsel %vm74, %v15, 0
  %v82 = vsel %vm74, %v16, 0
  %v85 = vsel %vm74, %v17, 0
  %v88 = vsel %vm74, %v18, 0
  %v91 = vsel %vm74, %v19, 0
  %v94 = vsel %vm74, %v20, 0
  %v97 = vsel %vm74, %v21, 0
  %99 = vmatprep.subr.mxu0 0.0
  %100 = vmatpush1.msra.mxu0 0.0
  %101 = vmatprep.subr.mxu0 0.0
  %102 = vmatpush1.msra.mxu0 0.0
  %103 = vmatprep.subr.mxu0 0.0
  %104 = vmatpush1.msra.mxu0 0.0
  %105 = vmatprep.subr.mxu0 0.0
  %106 = vmatpush1.msra.mxu0 0.0
  %107 = vmatprep.subr.mxu0 0.0
  %108 = vmatpush1.msra.mxu0 0.0
  %109 = vmatprep.subr.mxu0 0.0
  %110 = vmatpush1.msra.mxu0 0.0
  %111 = vmatprep.subr.mxu0 0.0
  %112 = vmatpush1.msra.mxu0 0.0
  %113 = vmatprep.subr.mxu0 0.0
  %114 = vmatpush1.msra.mxu0 0.0
  %115 = vmatprep.subr.mxu0 0.0
  %116 = vmatpush1.msra.mxu0 0.0
  %117 = vmatprep.subr.mxu0 0.0
  %118 = vmatpush1.msra.mxu0 0.0
  %119 = vmatprep.subr.mxu0 0.0
  %120 = vmatpush1.msra.mxu0 0.0
  %121 = vmatprep.subr.mxu0 0.0
  %122 = vmatpush1.msra.mxu0 0.0
  %123 = vmatprep.subr.mxu0 0.0
  %124 = vmatpush1.msra.mxu0 %v25
  %125 = vmatprep.subr.mxu0 0.0
  %126 = vmatpush1.msra.mxu0 %v24
  %127 = vmatprep.subr.mxu0 0.0
  %128 = vmatpush1.msra.mxu0 %v23
  %129 = vmatprep.subr.mxu0 0.0
  %130 = vmatpush1.msra.mxu0 %v22
  %131 = vmatprep.subr.mxu0 0.0
  %132 = vmatpush2.msra.mxu0 0.0
  %133 = vmatprep.subr.mxu0 0.0
  %134 = vmatpush2.msra.mxu0 0.0
  %135 = vmatprep.subr.mxu0 0.0
  %136 = vmatpush2.msra.mxu0 0.0
  %137 = vmatprep.subr.mxu0 0.0
  %138 = vmatpush2.msra.mxu0 0.0
  %139 = vmatprep.subr.mxu0 0.0
  %140 = vmatpush2.msra.mxu0 0.0
  %141 = vmatprep.subr.mxu0 0.0
  %142 = vmatpush2.msra.mxu0 0.0
  %143 = vmatprep.subr.mxu0 0.0
  %144 = vmatpush2.msra.mxu0 0.0
  %145 = vmatprep.subr.mxu0 0.0
  %146 = vmatpush2.msra.mxu0 0.0
  %147 = vmatprep.subr.mxu0 0.0
  %148 = vmatpush2.msra.mxu0 0.0
  %149 = vmatprep.subr.mxu0 0.0
  %150 = vmatpush2.msra.mxu0 0.0
  %151 = vmatprep.subr.mxu0 0.0
  %152 = vmatpush2.msra.mxu0 0.0
  %153 = vmatprep.subr.mxu0 0.0
  %154 = vmatpush2.msra.mxu0 0.0
  %155 = vmatprep.subr.mxu0 0.0
  %156 = vmatpush2.msra.mxu0 0.0
  %157 = vmatprep.subr.mxu0 0.0
  %158 = vmatpush2.msra.mxu0 0.0
  %159 = vmatprep.subr.mxu0 0.0
  %160 = vmatpush2.msra.mxu0 0.0
  %161 = vmatprep.subr.mxu0 0.0
  %162 = vmatpush2.msra.mxu0 0.0
  %163 = vmatprep.mubr.f32.mxu0 0.0
  %164 = vmatmul.mubr.f32.gmra.mxu0 %v76
  %v165 = vpop.f32.mrf.mxu0
  %v166 = vadd.f32 %v37, %v165
  %v167 = vpop.f32.mrf.mxu0
  %168 = vmatprep.mubr.f32.mxu0 0.0
  %169 = vmatmul.mubr.f32.gmra.mxu0 %v79
  %v170 = vpop.f32.mrf.mxu0
  %v171 = vadd.f32 %v42, %v170
  %v172 = vpop.f32.mrf.mxu0
  %173 = vmatprep.mubr.f32.mxu0 0.0
  %174 = vmatmul.mubr.f32.gmra.mxu0 %v82
  %v175 = vpop.f32.mrf.mxu0
  %v176 = vadd.f32 %v47, %v175
  %v177 = vpop.f32.mrf.mxu0
  %178 = vmatprep.mubr.f32.mxu0 0.0
  %179 = vmatmul.mubr.f32.gmra.mxu0 %v85
  %v180 = vpop.f32.mrf.mxu0
  %v181 = vadd.f32 %v52, %v180
  %v182 = vpop.f32.mrf.mxu0
  %183 = vmatprep.mubr.f32.mxu0 0.0
  %184 = vmatmul.mubr.f32.gmra.mxu0 %v88
  %v185 = vpop.f32.mrf.mxu0
  %v186 = vadd.f32 %v57, %v185
  %v187 = vpop.f32.mrf.mxu0
  %188 = vmatprep.mubr.f32.mxu0 0.0
  %189 = vmatmul.mubr.f32.gmra.mxu0 %v91
  %v190 = vpop.f32.mrf.mxu0
  %v191 = vadd.f32 %v62, %v190
  %v192 = vpop.f32.mrf.mxu0
  %193 = vmatprep.mubr.f32.mxu0 0.0
  %194 = vmatmul.mubr.f32.gmra.mxu0 %v94
  %v195 = vpop.f32.mrf.mxu0
  %v196 = vadd.f32 %v67, %v195
  %v197 = vpop.f32.mrf.mxu0
  %198 = vmatprep.mubr.f32.mxu0 0.0
  %199 = vmatmul.mubr.f32.gmra.mxu0 %v97
  %v200 = vpop.f32.mrf.mxu0
  %v201 = vadd.f32 %v72, %v200
  %v202 = vpop.f32.mrf.mxu0
  %203 = vdwg.mxu0
  %204 = vst.msk [vmem:[%s3] sm:$0xff] %vm74, %v166
  %205 = vst.msk [vmem:[%s3 + $0x8] sm:$0xff] %vm74, %v171
  %206 = vst.msk [vmem:[%s3 + $0x10] sm:$0xff] %vm74, %v176
  %207 = vst.msk [vmem:[%s3 + $0x18] sm:$0xff] %vm74, %v181
  %208 = vst.msk [vmem:[%s3 + $0x20] sm:$0xff] %vm74, %v186
  %209 = vst.msk [vmem:[%s3 + $0x28] sm:$0xff] %vm74, %v191
  %210 = vst.msk [vmem:[%s3 + $0x30] sm:$0xff] %vm74, %v196
  %211 = vst.msk [vmem:[%s3 + $0x38] sm:$0xff] %vm74, %v201
  // Predicated region
  $region14: #{tpu_custom_call.1} parent=0 // pred_check
    _
  $region15: #{tpu_custom_call.1} parent=0 // pred_check_branch
    %213 = sbr.rel (0) target = $region17
  $region16: #{tpu_custom_call.1} parent=0 // pred_region
    _
  $region17: #{tpu_custom_call.1} parent=0 // pred_fallthru
    _
  // Predicated region
  $region18: #{tpu_custom_call.1} parent=0 // pred_check
    _
  $region19: #{tpu_custom_call.1} parent=0 // pred_check_branch
    %215 = sbr.rel (0) target = $region21
  $region20: #{tpu_custom_call.1} parent=0 // pred_region
    _
  $region21: #{tpu_custom_call.1} parent=0 // pred_fallthru
    _

</llo_original>
